<compile_context>
chip_gen: v7x
topology: tpu7x:2x2x1
jax: 0.10.0
libtpu: 0.0.40
codegen_flags: <defaults>
</compile_context>

<pallas_src>
from functools import partial

import jax
import jax.numpy as jnp
from jax.experimental import pallas as pl
from jax.experimental.pallas import tpu as pltpu


def _round_up(x, m):
    return ((x + m - 1) // m) * m


# ----------------------------------------------------------------------------
# Kernel
# ----------------------------------------------------------------------------
def critic_kernel(x_ref, wbig_ref, b1p_ref, w2big_ref, b2_ref, w3_ref, b3_ref,
                  q_ref):
    hidden = b2_ref.shape[-1]

    # Stage 1: single lane-dense matmul over the block-diagonal fused weight.
    #   t[:, :H]  = state @ W1.T   (fc1 pre-activation)
    #   t[:, H:]  = action @ W2a   (action contribution to fc2)
    t = jnp.dot(x_ref[...], wbig_ref[...],
                preferred_element_type=jnp.float32)          # [tb, 2H] f32

    # Bias + relu on the fc1 half only; the action@W2a half passes through.
    lane = jax.lax.broadcasted_iota(jnp.int32, t.shape, 1)
    u = jnp.where(lane < hidden, jnp.maximum(t + b1p_ref[...], 0.0), t)

    # Stage 2: identity-augmented fc2 -> one K=2H matmul.
    #   u @ [W2s; I] = h1 @ W2s + (action @ W2a)
    z2 = jnp.dot(u.astype(w2big_ref.dtype), w2big_ref[...],
                 preferred_element_type=jnp.float32)          # [tb, H] f32
    h2 = jnp.maximum(z2 + b2_ref[...], 0.0)

    # fc3 (output width 1): VPU multiply + lane reduction, skip the MXU.
    q = jnp.sum(h2 * w3_ref[...], axis=-1, keepdims=True) + b3_ref[...]
    q_ref[...] = q.astype(q_ref.dtype)


# ----------------------------------------------------------------------------
# One-time parameter preparation (hoisted out of the hot path)
# ----------------------------------------------------------------------------
def prepare_params(params, compute_dtype=jnp.bfloat16):
    """(w1, b1, w2, b2, w3, b3) in nn.Linear layout -> fused kernel tensors."""
    (w1, b1, w2, b2, w3, b3) = params
    hidden = w1.shape[0]
    state_dim = w1.shape[1]
    action_dim = w2.shape[1] - hidden

    w1_t = w1.T.astype(jnp.float32)              # [S, H]
    w2_t = w2.T.astype(jnp.float32)              # [H+A, H]
    w2s, w2a = w2_t[:hidden], w2_t[hidden:]      # [H, H], [A, H]

    # Stage-1 fused weight: blockdiag(W1_t, W2a) -> [S+A, 2H]
    wbig = jnp.zeros((state_dim + action_dim, 2 * hidden), jnp.float32)
    wbig = wbig.at[:state_dim, :hidden].set(w1_t)
    wbig = wbig.at[state_dim:, hidden:].set(w2a)
    wbig = wbig.astype(compute_dtype)

    # Stage-2 fused weight: [W2s; I_H] -> [2H, H]
    w2big = jnp.concatenate(
        [w2s, jnp.eye(hidden, dtype=jnp.float32)], axis=0).astype(compute_dtype)

    b1p = jnp.concatenate([b1.astype(jnp.float32),
                           jnp.zeros((hidden,), jnp.float32)]).reshape(1, -1)
    b2_2d = b2.reshape(1, -1).astype(jnp.float32)
    w3_row = w3.reshape(1, -1).astype(jnp.float32)
    b3_2d = b3.reshape(1, 1).astype(jnp.float32)
    return (wbig, b1p, w2big, b2_2d, w3_row, b3_2d)


# ----------------------------------------------------------------------------
# Forward wrapper
# ----------------------------------------------------------------------------
def _choose_tile(B, block_b):
    """Batch tile: multiple of 8, <= block_b, and <= ceil(B/2) (rounded up to 8)
    so the parallel batch axis has >= 2 grid steps whenever B allows (v7x)."""
    if B <= 8:
        return max(B, 1)
    tb = min(block_b, _round_up(pl.cdiv(B, 2), 8), _round_up(B, 8))
    return max(tb, 8)


@partial(jax.jit, static_argnames=("block_b",))
def critic_forward(state, action, prepared, *, block_b=4096):
    """state: [B, state_dim], action: [B, action_dim] -> q: [B, 1] (f32)."""
    (wbig, b1p, w2big, b2, w3_row, b3) = prepared
    B = state.shape[0]
    in_dim = state.shape[1] + action.shape[1]
    hidden = b2.shape[1]
    cdt = wbig.dtype

    # The [state|action] concat is the single wrapper-side pass required by the
    # block-diagonal fusion; the bf16 cast is folded into the same XLA op so
    # the kernel reads half the input bytes.  No padding: ragged tails are a
    # partial last block (rows independent -> valid rows unaffected).
    x = jnp.concatenate([state, action], axis=1).astype(cdt)

    tb = _choose_tile(B, block_b)
    num_tiles = pl.cdiv(B, tb)

    flops = 2 * B * (in_dim * 2 * hidden + 2 * hidden * hidden + hidden)
    bytes_accessed = (B * in_dim * x.dtype.itemsize + B * 4
                      + wbig.size * wbig.dtype.itemsize
                      + w2big.size * w2big.dtype.itemsize
                      + (b1p.size + b2.size + w3_row.size + b3.size) * 4)

    def const_spec(arr):
        # Constant index_map -> weights/biases stay VMEM-resident across steps.
        return pl.BlockSpec(arr.shape, lambda i: (0, 0))

    q = pl.pallas_call(
        critic_kernel,
        out_shape=jax.ShapeDtypeStruct((B, 1), jnp.float32),
        grid=(num_tiles,),
        in_specs=[
            pl.BlockSpec((tb, in_dim), lambda i: (i, 0)),   # fused input tile
            const_spec(wbig),
            const_spec(b1p),
            const_spec(w2big),
            const_spec(b2),
            const_spec(w3_row),
            const_spec(b3),
        ],
        out_specs=pl.BlockSpec((tb, 1), lambda i: (i, 0)),
        compiler_params=pltpu.CompilerParams(
            dimension_semantics=("parallel",),
            # Tiles up to block_b=8192 keep the footprint well under this on
            # every generation (incl. v7x's 64 MiB physical VMEM).
            vmem_limit_bytes=32 * 1024 * 1024),
        cost_estimate=pl.CostEstimate(
            flops=flops, transcendentals=0, bytes_accessed=bytes_accessed),
    )(x, wbig, b1p, w2big, b2, w3_row, b3)

    return q


# ----------------------------------------------------------------------------
# Parameter init (matches the module's init scheme) and references
# ----------------------------------------------------------------------------
def init_params(key, state_dim, action_dim, hidden_dim=64):
    """Weights: xavier_uniform. fc3 bias: zeros. fc1/fc2 biases: small uniform."""
    def xavier(k, out_f, in_f):
        bound = jnp.sqrt(6.0 / (in_f + out_f))
        return jax.random.uniform(k, (out_f, in_f), jnp.float32, -bound, bound)

    k1, k2, k3, k4, k5 = jax.random.split(key, 5)
    w1 = xavier(k1, hidden_dim, state_dim)
    b1 = jax.random.uniform(k4, (hidden_dim,), jnp.float32,
                            -1.0 / jnp.sqrt(state_dim), 1.0 / jnp.sqrt(state_dim))
    w2 = xavier(k2, hidden_dim, hidden_dim + action_dim)
    b2 = jax.random.uniform(k5, (hidden_dim,), jnp.float32,
                            -1.0 / jnp.sqrt(hidden_dim + action_dim),
                            1.0 / jnp.sqrt(hidden_dim + action_dim))
    w3 = xavier(k3, 1, hidden_dim)
    b3 = jnp.zeros((1,), jnp.float32)
    return (w1, b1, w2, b2, w3, b3)


def critic_ref(state, action, params):
    """Pure-f32 JAX reference (mirrors the PyTorch forward exactly)."""
    (w1, b1, w2, b2, w3, b3) = params
    h1 = jax.nn.relu(state @ w1.T + b1)
    x = jnp.concatenate([h1, action], axis=1)
    h2 = jax.nn.relu(x @ w2.T + b2)
    return h2 @ w3.T + b3


def critic_ref_prepared(state, action, prepared):
    """Reference with the kernel's exact fused numerics (bf16 ops, f32 accum)."""
    (wbig, b1p, w2big, b2, w3_row, b3) = prepared
    hidden = b2.shape[1]
    x = jnp.concatenate([state, action], axis=1).astype(wbig.dtype)
    t = jnp.dot(x, wbig, preferred_element_type=jnp.float32)
    lane = jnp.arange(t.shape[-1])[None, :]
    u = jnp.where(lane < hidden, jnp.maximum(t + b1p, 0.0), t)
    z2 = jnp.dot(u.astype(w2big.dtype), w2big, preferred_element_type=jnp.float32)
    h2 = jnp.maximum(z2 + b2, 0.0)
    return jnp.sum(h2 * w3_row, axis=-1, keepdims=True) + b3


# ----------------------------------------------------------------------------
# Demo / correctness check
# ----------------------------------------------------------------------------
if __name__ == "__main__":
    B, STATE_DIM, ACTION_DIM, HIDDEN = 8, 16, 4, 64

    key = jax.random.PRNGKey(0)
    k_s, k_a, k_p = jax.random.split(key, 3)
    state = jax.random.normal(k_s, (B, STATE_DIM), jnp.float32)
    action = jax.random.normal(k_a, (B, ACTION_DIM), jnp.float32)
    params = init_params(k_p, STATE_DIM, ACTION_DIM, HIDDEN)
    prepared = prepare_params(params)

    q = jax.block_until_ready(critic_forward(state, action, prepared))
    assert q.shape == (B, 1)

    # Tight check vs a reference using the kernel's exact fused numerics.
    q_tight = critic_ref_prepared(state, action, prepared)
    assert jnp.allclose(q, q_tight, atol=1e-2, rtol=1e-2), "mismatch vs bf16 reference"
    # Loose check vs the pure-f32 PyTorch-equivalent forward (bf16 tolerance).
    q_f32 = critic_ref(state, action, params)
    assert jnp.allclose(q, q_f32, atol=1e-1, rtol=1e-1), "mismatch vs f32 reference"

    # Exercise the ragged / multi-step grid path (partial last block, grid > 1).
    B2 = 50
    k_s2, k_a2 = jax.random.split(jax.random.PRNGKey(1), 2)
    state2 = jax.random.normal(k_s2, (B2, STATE_DIM), jnp.float32)
    action2 = jax.random.normal(k_a2, (B2, ACTION_DIM), jnp.float32)
    q2 = jax.block_until_ready(
        critic_forward(state2, action2, prepared, block_b=16))
    assert q2.shape == (B2, 1)
    q2_tight = critic_ref_prepared(state2, action2, prepared)
    assert jnp.allclose(q2, q2_tight, atol=1e-2, rtol=1e-2), "mismatch on ragged batch"

    print("KERNEL_OK")
</pallas_src>

<mosaic_0001>
module attributes {stable_mosaic.version = 11 : i64} {
  func.func @critic_kernel(%arg0: i32, %arg1: memref<8x20xbf16, #tpu.memory_space<vmem>>, %arg2: memref<20x128xbf16, #tpu.memory_space<vmem>>, %arg3: memref<1x128xf32, #tpu.memory_space<vmem>>, %arg4: memref<128x64xbf16, #tpu.memory_space<vmem>>, %arg5: memref<1x64xf32, #tpu.memory_space<vmem>>, %arg6: memref<1x64xf32, #tpu.memory_space<vmem>>, %arg7: memref<1x1xf32, #tpu.memory_space<vmem>>, %arg8: memref<8x1xf32, #tpu.memory_space<vmem>>) attributes {dimension_semantics = [#tpu.dimension_semantics<parallel>], iteration_bounds = array<i64: 1>, scalar_prefetch = 0 : i64, scratch_operands = 0 : i64, tpu.core_type = #tpu.core_type<tc>, window_params = [{transform_indices = @transform_0, window_bounds = array<i64: 8, 20>}, {pipeline_mode = #tpu.pipeline_mode<synchronous>, transform_indices = @transform_1, window_bounds = array<i64: 20, 128>}, {pipeline_mode = #tpu.pipeline_mode<synchronous>, transform_indices = @transform_2, window_bounds = array<i64: 1, 128>}, {pipeline_mode = #tpu.pipeline_mode<synchronous>, transform_indices = @transform_3, window_bounds = array<i64: 128, 64>}, {pipeline_mode = #tpu.pipeline_mode<synchronous>, transform_indices = @transform_4, window_bounds = array<i64: 1, 64>}, {pipeline_mode = #tpu.pipeline_mode<synchronous>, transform_indices = @transform_5, window_bounds = array<i64: 1, 64>}, {pipeline_mode = #tpu.pipeline_mode<synchronous>, transform_indices = @transform_6, window_bounds = array<i64: 1, 1>}, {transform_indices = @transform_7, window_bounds = array<i64: 8, 1>}]} {
    %c0 = arith.constant 0 : index
    %c0_0 = arith.constant 0 : index
    %0 = vector.load %arg1[%c0, %c0_0] : memref<8x20xbf16, #tpu.memory_space<vmem>>, vector<8x20xbf16>
    %c0_1 = arith.constant 0 : index
    %c0_2 = arith.constant 0 : index
    %1 = vector.load %arg2[%c0_1, %c0_2] : memref<20x128xbf16, #tpu.memory_space<vmem>>, vector<20x128xbf16>
    %cst = arith.constant dense<0.000000e+00> : vector<8x128xf32>
    %2 = tpu.matmul %0, %1, %cst {dimension_numbers = #tpu.dot_dimension_numbers<[1], [0], [0], [1], [0, 0, 1, 1], [], []>} : vector<8x20xbf16>, vector<20x128xbf16>, vector<8x128xf32> -> vector<8x128xf32>
    %3 = tpu.iota {dimensions = array<i32: 1>} : vector<8x128xi32>
    %c64_i32 = arith.constant 64 : i32
    %4 = vector.broadcast %c64_i32 : i32 to vector<8x128xi32>
    %5 = arith.cmpi slt, %3, %4 : vector<8x128xi32>
    %c0_3 = arith.constant 0 : index
    %c0_4 = arith.constant 0 : index
    %6 = vector.load %arg3[%c0_3, %c0_4] : memref<1x128xf32, #tpu.memory_space<vmem>>, vector<1x128xf32>
    %7 = vector.broadcast %6 : vector<1x128xf32> to vector<8x128xf32>
    %8 = arith.addf %2, %7 : vector<8x128xf32>
    %cst_5 = arith.constant 0.000000e+00 : f32
    %9 = vector.broadcast %cst_5 : f32 to vector<8x128xf32>
    %10 = arith.maximumf %8, %9 : vector<8x128xf32>
    %11 = arith.select %5, %10, %2 : vector<8x128xi1>, vector<8x128xf32>
    %12 = arith.truncf %11 : vector<8x128xf32> to vector<8x128xbf16>
    %c0_6 = arith.constant 0 : index
    %c0_7 = arith.constant 0 : index
    %13 = vector.load %arg4[%c0_6, %c0_7] : memref<128x64xbf16, #tpu.memory_space<vmem>>, vector<128x64xbf16>
    %cst_8 = arith.constant dense<0.000000e+00> : vector<8x64xf32>
    %14 = tpu.matmul %12, %13, %cst_8 {dimension_numbers = #tpu.dot_dimension_numbers<[1], [0], [0], [1], [0, 0, 1, 1], [], []>} : vector<8x128xbf16>, vector<128x64xbf16>, vector<8x64xf32> -> vector<8x64xf32>
    %c0_9 = arith.constant 0 : index
    %c0_10 = arith.constant 0 : index
    %15 = vector.load %arg5[%c0_9, %c0_10] : memref<1x64xf32, #tpu.memory_space<vmem>>, vector<1x64xf32>
    %16 = vector.broadcast %15 : vector<1x64xf32> to vector<8x64xf32>
    %17 = arith.addf %14, %16 : vector<8x64xf32>
    %cst_11 = arith.constant 0.000000e+00 : f32
    %18 = vector.broadcast %cst_11 : f32 to vector<8x64xf32>
    %19 = arith.maximumf %17, %18 : vector<8x64xf32>
    %c0_12 = arith.constant 0 : index
    %c0_13 = arith.constant 0 : index
    %20 = vector.load %arg6[%c0_12, %c0_13] : memref<1x64xf32, #tpu.memory_space<vmem>>, vector<1x64xf32>
    %21 = vector.broadcast %20 : vector<1x64xf32> to vector<8x64xf32>
    %22 = arith.mulf %19, %21 : vector<8x64xf32>
    %cst_14 = arith.constant dense<0.000000e+00> : vector<8xf32>
    %23 = vector.multi_reduction <add>, %22, %cst_14 [1] : vector<8x64xf32> to vector<8xf32>
    %24 = vector.shape_cast %23 : vector<8xf32> to vector<8x1xf32>
    %c0_15 = arith.constant 0 : index
    %c0_16 = arith.constant 0 : index
    %25 = vector.load %arg7[%c0_15, %c0_16] : memref<1x1xf32, #tpu.memory_space<vmem>>, vector<1x1xf32>
    %26 = vector.broadcast %25 : vector<1x1xf32> to vector<8x1xf32>
    %27 = arith.addf %24, %26 : vector<8x1xf32>
    %c0_17 = arith.constant 0 : index
    %c0_18 = arith.constant 0 : index
    %28 = vector.load %arg8[%c0_17, %c0_18] : memref<8x1xf32, #tpu.memory_space<vmem>>, vector<8x1xf32>
    tpu.vector_store %arg8[%c0_17, %c0_18], %27 {strides = array<i32>} : memref<8x1xf32, #tpu.memory_space<vmem>>, vector<8x1xf32>,
    return
  }
  func.func @transform_0(%arg0: i32) -> (i32, i32) {
    %c0_i32 = arith.constant 0 : i32
    %c0_i32_0 = arith.constant 0 : i32
    return %arg0, %c0_i32 : i32, i32
  }
  func.func @transform_1(%arg0: i32) -> (i32, i32) {
    %c0_i32 = arith.constant 0 : i32
    %c0_i32_0 = arith.constant 0 : i32
    %c0_i32_1 = arith.constant 0 : i32
    return %c0_i32, %c0_i32_0 : i32, i32
  }
  func.func @transform_2(%arg0: i32) -> (i32, i32) {
    %c0_i32 = arith.constant 0 : i32
    %c0_i32_0 = arith.constant 0 : i32
    %c0_i32_1 = arith.constant 0 : i32
    return %c0_i32, %c0_i32_0 : i32, i32
  }
  func.func @transform_3(%arg0: i32) -> (i32, i32) {
    %c0_i32 = arith.constant 0 : i32
    %c0_i32_0 = arith.constant 0 : i32
    %c0_i32_1 = arith.constant 0 : i32
    return %c0_i32, %c0_i32_0 : i32, i32
  }
  func.func @transform_4(%arg0: i32) -> (i32, i32) {
    %c0_i32 = arith.constant 0 : i32
    %c0_i32_0 = arith.constant 0 : i32
    %c0_i32_1 = arith.constant 0 : i32
    return %c0_i32, %c0_i32_0 : i32, i32
  }
  func.func @transform_5(%arg0: i32) -> (i32, i32) {
    %c0_i32 = arith.constant 0 : i32
    %c0_i32_0 = arith.constant 0 : i32
    %c0_i32_1 = arith.constant 0 : i32
    return %c0_i32, %c0_i32_0 : i32, i32
  }
  func.func @transform_6(%arg0: i32) -> (i32, i32) {
    %c0_i32 = arith.constant 0 : i32
    %c0_i32_0 = arith.constant 0 : i32
    %c0_i32_1 = arith.constant 0 : i32
    return %c0_i32, %c0_i32_0 : i32, i32
  }
  func.func @transform_7(%arg0: i32) -> (i32, i32) {
    %c0_i32 = arith.constant 0 : i32
    %c0_i32_0 = arith.constant 0 : i32
    return %arg0, %c0_i32 : i32, i32
  }
}

</mosaic_0001>

<llo_original>
// kernel: critic_forward.1
$region0: #{critic_forward.1}
  #allocation0 [shape = 'u32[]', space=smem, size = 0x4, offset = 0x4, fixed_abs, tag = 'smem constant byte address 0x4 - core index']
  #allocation1 [shape = 'u32[144,128]{1,0:T(1,128)}', space=vmem, size = 0x12000, scoped, tag = 'internal scratch']
  #allocation2 [shape = 'f32[1,1]{1,0:T(1,128)S(1)}', space=vmem, size = 0x200, scoped, tag = 'scoped memory for critic_forward.1']
  %s0 = inlined_call_operand.vmem [shape: bf16[8,20], index: 0, kind: input, shape index: {}]
  %s1 = inlined_call_operand.vmem [shape: bf16[20,128], index: 1, kind: input, shape index: {}]
  %s2 = inlined_call_operand.vmem [shape: f32[1,128], index: 2, kind: input, shape index: {}]
  %s3 = inlined_call_operand.vmem [shape: bf16[128,64], index: 3, kind: input, shape index: {}]
  %s4 = inlined_call_operand.vmem [shape: f32[1,64], index: 4, kind: input, shape index: {}]
  %s5 = inlined_call_operand.vmem [shape: f32[1,64], index: 5, kind: input, shape index: {}]
  %s6 = inlined_call_operand.<no memory space> [shape: f32[1,1], index: 6, kind: input, shape index: {}]
  %s7 = inlined_call_operand.vmem [shape: f32[8,1], index: 7, kind: output, shape index: {}]
  %s8 = sld [smem:[#allocation0]]
  $region38: #{critic_forward.1} parent=0
    _
  %s10 = ssub.s32 1, %s8
  %s11 = scalar_select 0, %s10, %s8
  %v12 = vstv %s6
  %13 = vst [vmem:[#allocation2] sm:$0x1] %v12
  // Predicated region
  $region2: #{critic_forward.1} parent=0 // pred_check
    _
  $region3: #{critic_forward.1} parent=0 // pred_check_branch
    %15 = sbr.rel (0) target = $region5
  $region4: #{critic_forward.1} parent=0 // pred_region
    _
  $region5: #{critic_forward.1} parent=0 // pred_fallthru
    _
  // Predicated region
  $region6: #{critic_forward.1} parent=0 // pred_check
    _
  $region7: #{critic_forward.1} parent=0 // pred_check_branch
    %17 = sbr.rel (0) target = $region9
  $region8: #{critic_forward.1} parent=0 // pred_region
    _
  $region9: #{critic_forward.1} parent=0 // pred_fallthru
    _
  // Predicated region
  $region10: #{critic_forward.1} parent=0 // pred_check
    _
  $region11: #{critic_forward.1} parent=0 // pred_check_branch
    %19 = sbr.rel (0) target = $region13
  $region12: #{critic_forward.1} parent=0 // pred_region
    _
  $region13: #{critic_forward.1} parent=0 // pred_fallthru
    _
  // Predicated region
  $region14: #{critic_forward.1} parent=0 // pred_check
    _
  $region15: #{critic_forward.1} parent=0 // pred_check_branch
    %21 = sbr.rel (0) target = $region17
  $region16: #{critic_forward.1} parent=0 // pred_region
    _
  $region17: #{critic_forward.1} parent=0 // pred_fallthru
    _
  // Predicated region
  $region18: #{critic_forward.1} parent=0 // pred_check
    _
  $region19: #{critic_forward.1} parent=0 // pred_check_branch
    %23 = sbr.rel (0) target = $region21
  $region20: #{critic_forward.1} parent=0 // pred_region
    _
  $region21: #{critic_forward.1} parent=0 // pred_fallthru
    _
  // Predicated region
  $region22: #{critic_forward.1} parent=0 // pred_check
    _
  $region23: #{critic_forward.1} parent=0 // pred_check_branch
    %25 = sbr.rel (0) target = $region25
  $region24: #{critic_forward.1} parent=0 // pred_region
    _
  $region25: #{critic_forward.1} parent=0 // pred_fallthru
    _
  // Predicated region
  $region26: #{critic_forward.1} parent=0 // pred_check
    _
  $region27: #{critic_forward.1} parent=0 // pred_check_branch
    %27 = sbr.rel (0) target = $region29
  $region28: #{critic_forward.1} parent=0 // pred_region
    _
  $region29: #{critic_forward.1} parent=0 // pred_fallthru
    _
  %v29 = vld [vmem:[%s0] sm:$0xf]
  %v30 = vld [vmem:[%s1] sm:$0xf]
  %v31 = vld [vmem:[%s1 + $0x4] sm:$0xf]
  %v32 = vld [vmem:[%s1 + $0x8] sm:$0x3]
  %v36 = vunpack.c.l.b16 %v30
  %v37 = vunpack.c.l.b16 %v31
  %v38 = vunpack.c.l.b16 %v32
  %v39 = vpack.c.b16 %v37, %v36
  %v40 = vpack.c.b16 %v38, %v38
  %vm42 = vcmask 162816
  %v44 = vsel %vm42, %v29, 0
  %vm46 = vcmask 1041408
  %v48 = vsel %vm46, %v40, 0
  %50 = vmatprep.subr.bf16.mxu0 0
  %51 = vmatpush1.bf16.msra.mxu0 %v39
  %52 = vmatprep.subr.bf16.mxu0 0
  %53 = vmatpush1.bf16.msra.mxu0 %v48
  %54 = vmatprep.subr.bf16.mxu0 0
  %55 = vmatpush1.bf16.msra.mxu0 0
  %56 = vmatprep.subr.bf16.mxu0 0
  %57 = vmatpush1.bf16.msra.mxu0 0
  %58 = vmatprep.subr.bf16.mxu0 0
  %59 = vmatpush1.bf16.msra.mxu0 0
  %60 = vmatprep.subr.bf16.mxu0 0
  %61 = vmatpush1.bf16.msra.mxu0 0
  %62 = vmatprep.subr.bf16.mxu0 0
  %63 = vmatpush1.bf16.msra.mxu0 0
  %64 = vmatprep.subr.bf16.mxu0 0
  %65 = vmatpush1.bf16.msra.mxu0 0
  %66 = vmatprep.subr.bf16.mxu0 0
  %67 = vmatpush1.bf16.msra.mxu0 0
  %68 = vmatprep.subr.bf16.mxu0 0
  %69 = vmatpush1.bf16.msra.mxu0 0
  %70 = vmatprep.subr.bf16.mxu0 0
  %71 = vmatpush1.bf16.msra.mxu0 0
  %72 = vmatprep.subr.bf16.mxu0 0
  %73 = vmatpush1.bf16.msra.mxu0 0
  %74 = vmatprep.subr.bf16.mxu0 0
  %75 = vmatpush1.bf16.msra.mxu0 0
  %76 = vmatprep.subr.bf16.mxu0 0
  %77 = vmatpush1.bf16.msra.mxu0 0
  %78 = vmatprep.subr.bf16.mxu0 0
  %79 = vmatpush1.bf16.msra.mxu0 0
  %80 = vmatprep.subr.bf16.mxu0 0
  %81 = vmatpush1.bf16.msra.mxu0 0
  %82 = vmatprep.mubr.bf16.mxu0 0
  %83 = vmatmul.mubr.bf16.gmra.mrb[0].mxu0 %v44
  %v84 = vpop.f32.mrb[0].mxu0
  %v85 = vadd.f32 0.0, %v84
  %v86 = vpop.f32.mrb[0].mxu0
  %v87 = vpop.f32.mrb[0].mxu0
  %v88 = vpop.f32.mrb[0].mxu0
  %89 = vdwg.mxu0
  %v90 = vlaneseq
  %v91 = vand.u32 %v90, 127
  %vm92 = vcmp.lt.s32.totalorder %v91, 64
  %v93 = vld [vmem:[%s2] sm:$0x1]
  %v95 = vlaneseq
  %v96 = vshrl.u32 %v95, 7
  %v97 = vsub.s32 0, %v96
  %v98 = vrot.slane %v93, %v97
  %v100 = vadd.f32 %v85, %v98
  %v101 = vmax.f32 %v100, 0.0
  %v102 = vsel %vm92, %v101, %v85
  %v103 = vpack.c.bf16 %v102, %v102
  %v104 = vld [vmem:[%s3] sm:$0xf]
  %v105 = vld [vmem:[%s3 + $0x4] sm:$0xf]
  %v106 = vld [vmem:[%s3 + $0x8] sm:$0xf]
  %v107 = vld [vmem:[%s3 + $0xc] sm:$0xf]
  %v108 = vld [vmem:[%s3 + $0x10] sm:$0xf]
  %v109 = vld [vmem:[%s3 + $0x14] sm:$0xf]
  %v110 = vld [vmem:[%s3 + $0x18] sm:$0xf]
  %v111 = vld [vmem:[%s3 + $0x1c] sm:$0xf]
  %v112 = vld [vmem:[%s3 + $0x20] sm:$0xf]
  %v113 = vld [vmem:[%s3 + $0x24] sm:$0xf]
  %v114 = vld [vmem:[%s3 + $0x28] sm:$0xf]
  %v115 = vld [vmem:[%s3 + $0x2c] sm:$0xf]
  %v116 = vld [vmem:[%s3 + $0x30] sm:$0xf]
  %v117 = vld [vmem:[%s3 + $0x34] sm:$0xf]
  %v118 = vld [vmem:[%s3 + $0x38] sm:$0xf]
  %v119 = vld [vmem:[%s3 + $0x3c] sm:$0xf]
  %v120 = vld [vmem:[%s4] sm:$0x1]
  %v122 = vlaneseq
  %v123 = vshrl.u32 %v122, 7
  %v124 = vsub.s32 0, %v123
  %v125 = vrot.slane %v120, %v124
  %v143 = vunpack.c.l.b16 %v104
  %v144 = vunpack.c.l.b16 %v105
  %v145 = vunpack.c.l.b16 %v106
  %v146 = vunpack.c.l.b16 %v107
  %v147 = vunpack.c.l.b16 %v108
  %v148 = vunpack.c.l.b16 %v109
  %v149 = vunpack.c.l.b16 %v110
  %v150 = vunpack.c.l.b16 %v111
  %v151 = vunpack.c.l.b16 %v112
  %v152 = vunpack.c.l.b16 %v113
  %v153 = vunpack.c.l.b16 %v114
  %v154 = vunpack.c.l.b16 %v115
  %v155 = vunpack.c.l.b16 %v116
  %v156 = vunpack.c.l.b16 %v117
  %v157 = vunpack.c.l.b16 %v118
  %v158 = vunpack.c.l.b16 %v119
  %v159 = vpack.c.b16 %v144, %v143
  %v160 = vpack.c.b16 %v146, %v145
  %v161 = vpack.c.b16 %v148, %v147
  %v162 = vpack.c.b16 %v150, %v149
  %v163 = vpack.c.b16 %v152, %v151
  %v164 = vpack.c.b16 %v154, %v153
  %v165 = vpack.c.b16 %v156, %v155
  %v166 = vpack.c.b16 %v158, %v157
  %175 = vmatprep.subr.bf16.mxu0 0
  %176 = vmatpush1.bf16.msra.mxu0 %v159
  %177 = vmatprep.subr.bf16.mxu0 0
  %178 = vmatpush1.bf16.msra.mxu0 %v160
  %179 = vmatprep.subr.bf16.mxu0 0
  %180 = vmatpush1.bf16.msra.mxu0 %v161
  %181 = vmatprep.subr.bf16.mxu0 0
  %182 = vmatpush1.bf16.msra.mxu0 %v162
  %183 = vmatprep.subr.bf16.mxu0 0
  %184 = vmatpush1.bf16.msra.mxu0 %v163
  %185 = vmatprep.subr.bf16.mxu0 0
  %186 = vmatpush1.bf16.msra.mxu0 %v164
  %187 = vmatprep.subr.bf16.mxu0 0
  %188 = vmatpush1.bf16.msra.mxu0 %v165
  %189 = vmatprep.subr.bf16.mxu0 0
  %190 = vmatpush1.bf16.msra.mxu0 %v166
  %191 = vmatprep.subr.bf16.mxu0 0
  %192 = vmatpush1.bf16.msra.mxu0 0
  %193 = vmatprep.subr.bf16.mxu0 0
  %194 = vmatpush1.bf16.msra.mxu0 0
  %195 = vmatprep.subr.bf16.mxu0 0
  %196 = vmatpush1.bf16.msra.mxu0 0
  %197 = vmatprep.subr.bf16.mxu0 0
  %198 = vmatpush1.bf16.msra.mxu0 0
  %199 = vmatprep.subr.bf16.mxu0 0
  %200 = vmatpush1.bf16.msra.mxu0 0
  %201 = vmatprep.subr.bf16.mxu0 0
  %202 = vmatpush1.bf16.msra.mxu0 0
  %203 = vmatprep.subr.bf16.mxu0 0
  %204 = vmatpush1.bf16.msra.mxu0 0
  %205 = vmatprep.subr.bf16.mxu0 0
  %206 = vmatpush1.bf16.msra.mxu0 0
  %207 = vmatprep.mubr.bf16.mxu0 0
  %208 = vmatmul.mubr.bf16.gmra.mrb[0].mxu0 %v103
  %v209 = vpop.f32.mrb[0].mxu0
  %v210 = vadd.f32 %v125, %v209
  %v211 = vpop.f32.mrb[0].mxu0
  %v212 = vpop.f32.mrb[0].mxu0
  %v213 = vpop.f32.mrb[0].mxu0
  %214 = vdwg.mxu0
  %v215 = vmax.f32 %v210, 0.0
  %v216 = vld [vmem:[%s5] sm:$0x1]
  %v218 = vlaneseq
  %v219 = vshrl.u32 %v218, 7
  %v220 = vsub.s32 0, %v219
  %v221 = vrot.slane %v216, %v220
  %v223 = vmul.f32 %v215, %v221
  %vm224 = vcmask 523264
  %v225 = vsel %vm224, %v223, 0.0
  %226 = vadd.xlane.f32.xlu0 %v225
  %v227 = vpop.xlane.xlu0 %226
  %v228 = vld [vmem:[#allocation2] sm:$0x1]
  %v230 = vlaneseq
  %v231 = vshrl.u32 %v230, 7
  %v232 = vsub.s32 0, %v231
  %v233 = vrot.slane %v228, %v232
  %v235 = vadd.f32 %v227, %v233
  %vm236 = vcmask 7168
  %237 = vst.msk [vmem:[%s7] sm:$0xff] %vm236, %v235
  // Predicated region
  $region30: #{critic_forward.1} parent=0 // pred_check
    _
  $region31: #{critic_forward.1} parent=0 // pred_check_branch
    %239 = sbr.rel (0) target = $region33
  $region32: #{critic_forward.1} parent=0 // pred_region
    _
  $region33: #{critic_forward.1} parent=0 // pred_fallthru
    _
  // Predicated region
  $region34: #{critic_forward.1} parent=0 // pred_check
    _
  $region35: #{critic_forward.1} parent=0 // pred_check_branch
    %241 = sbr.rel (0) target = $region37
  $region36: #{critic_forward.1} parent=0 // pred_region
    _
  $region37: #{critic_forward.1} parent=0 // pred_fallthru
    _

</llo_original>
